<compile_context>
chip_gen: v5e
topology: v5e:2x2
jax: 0.10.0
libtpu: 0.0.40
codegen_flags: <defaults>
</compile_context>

<pallas_src>
import jax
import jax.numpy as jnp
from jax.experimental import pallas as pl
from jax.experimental.pallas import tpu as pltpu


def _scatter_kernel(rows_ref, feat_ref, canvas_alias_ref, canvas_ref, sems):
    """Scatter one block of pillar feature rows into the HBM BEV canvas.

    rows_ref        : (M_pad,) int32 in SMEM  -- flat destination row per pillar
    feat_ref        : (block_m, C) in VMEM    -- pillar features for this block
    canvas_alias_ref: (R, C) in HBM           -- aliased zero-initialized canvas (unused)
    canvas_ref      : (R, C) in HBM           -- output canvas (same buffer)
    sems            : (nsem,) DMA semaphores  -- ring of in-flight row copies
    """
    del canvas_alias_ref  # aliased with canvas_ref; zeros provided by the wrapper

    block_m = feat_ref.shape[0]
    nsem = sems.shape[0]
    base = pl.program_id(0) * block_m

    def row_copy(j):
        row = rows_ref[base + j]                       # scalar read from SMEM
        return pltpu.make_async_copy(
            feat_ref.at[j],                            # (C,) row in VMEM
            canvas_ref.at[row],                        # (C,) row in HBM
            sems.at[j % nsem],
        )

    # Issue loop: keep up to `nsem` row-DMAs in flight (wait before slot reuse).
    @pl.loop(0, block_m)
    def _issue(j):
        @pl.when(j >= nsem)
        def _wait_prev():
            row_copy(j - nsem).wait()

        row_copy(j).start()

    # Drain the last `nsem` outstanding copies before the block's feature
    # buffer can be recycled by the pipeline.
    @pl.loop(block_m - nsem, block_m)
    def _drain(j):
        row_copy(j).wait()


def pointpillar_scatter(pillar_features, coords, *, batch_size, grid_size,
                        block_m=128):
    """Pallas PointPillarScatter forward.

    pillar_features : (M, C) float
    coords          : (M, 4) int  -- columns (batch_idx, z_idx, y_idx, x_idx)
    batch_size      : static int
    grid_size       : (nx, ny, nz) with nz == 1
    """
    nx, ny, nz = (int(g) for g in grid_size)
    assert nz == 1
    assert block_m % 8 == 0
    M, C = pillar_features.shape
    assert M > 0
    nyx = ny * nx

    coords = coords.astype(jnp.int32)
    # Flat row into the (B*ny*nx, C) canvas:  b*ny*nx + z + y*nx + x  (z == 0).
    rows = (coords[:, 0] * nyx + coords[:, 1] + coords[:, 2] * nx
            + coords[:, 3]).astype(jnp.int32)

    num_blocks = (M + block_m - 1) // block_m
    m_pad = num_blocks * block_m
    n_rows = batch_size * nyx
    dump_row = n_rows                    # padded pillars land here, sliced off below
    total_rows = n_rows + 8              # small sublane-aligned dump region

    rows_p = jnp.full((m_pad,), dump_row, dtype=jnp.int32).at[:M].set(rows)
    feats_p = jnp.zeros((m_pad, C), dtype=pillar_features.dtype).at[:M].set(
        pillar_features)
    canvas0 = jnp.zeros((total_rows, C), dtype=pillar_features.dtype)

    nsem = min(16, block_m)
    itemsize = jnp.dtype(pillar_features.dtype).itemsize

    canvas = pl.pallas_call(
        _scatter_kernel,
        grid=(num_blocks,),
        in_specs=[
            # Per-pillar destination rows as scalars in SMEM.
            pl.BlockSpec(memory_space=pltpu.MemorySpace.SMEM),
            # Pillar feature block, auto-pipelined into VMEM.
            pl.BlockSpec((block_m, C), lambda i: (i, 0)),
            # Zero-initialized canvas in HBM, aliased to the output.
            pl.BlockSpec(memory_space=pl.ANY),
        ],
        out_specs=pl.BlockSpec(memory_space=pl.ANY),
        out_shape=jax.ShapeDtypeStruct((total_rows, C), pillar_features.dtype),
        scratch_shapes=[pltpu.SemaphoreType.DMA((nsem,))],
        input_output_aliases={2: 0},     # canvas0 (input 2) -> output 0
        compiler_params=pltpu.CompilerParams(
            # Blocks write disjoint canvas rows, so this could be "parallel"
            # on multi-TensorCore chips; "arbitrary" kept for safety.
            dimension_semantics=("arbitrary",)),
        cost_estimate=pl.CostEstimate(
            flops=0,
            transcendentals=0,
            bytes_accessed=int((2 * m_pad * C + total_rows * C) * itemsize)),
    )(rows_p, feats_p, canvas0)

    canvas = canvas[:n_rows]                                 # drop dump rows
    bev = canvas.reshape(batch_size, ny, nx, C)
    # Match the PyTorch output layout (B, C*nz, ny, nx).
    return jnp.transpose(bev, (0, 3, 1, 2)).reshape(batch_size, C * nz, ny, nx)


def pointpillar_scatter_reference(pillar_features, coords, batch_size, grid_size):
    """Pure-JAX reference mirroring the PyTorch forward."""
    nx, ny, nz = (int(g) for g in grid_size)
    C = pillar_features.shape[1]
    coords = coords.astype(jnp.int32)
    canvas = jnp.zeros((batch_size, C, nz * ny * nx), pillar_features.dtype)
    spatial_idx = coords[:, 1] + coords[:, 2] * nx + coords[:, 3]
    canvas = canvas.at[coords[:, 0], :, spatial_idx].set(pillar_features)
    return canvas.reshape(batch_size, C * nz, ny, nx)


if __name__ == "__main__":
    key = jax.random.PRNGKey(0)
    k_feat, k_c0, k_c1 = jax.random.split(key, 3)

    # Small shapes consistent with PointPillarScatter usage:
    #   batch_size=2, BEV grid nx=32, ny=16, nz=1, NUM_BEV_FEATURES=64,
    #   200 pillars total (110 in batch 0, 90 in batch 1), unique cells.
    batch_size = 2
    nx, ny, nz = 32, 16, 1
    C = 64
    grid_size = (nx, ny, nz)
    nyx = ny * nx

    m0, m1 = 110, 90
    cells0 = jax.random.permutation(k_c0, nyx)[:m0]
    cells1 = jax.random.permutation(k_c1, nyx)[:m1]

    def make_coords(cells, b):
        y = cells // nx
        x = cells % nx
        z = jnp.zeros_like(cells)
        bcol = jnp.full_like(cells, b)
        return jnp.stack([bcol, z, y, x], axis=1)

    coords = jnp.concatenate(
        [make_coords(cells0, 0), make_coords(cells1, 1)], axis=0
    ).astype(jnp.int32)
    M = coords.shape[0]
    pillar_features = jax.random.normal(k_feat, (M, C), dtype=jnp.float32)

    out = pointpillar_scatter(
        pillar_features, coords,
        batch_size=batch_size, grid_size=grid_size, block_m=128)
    out = jax.block_until_ready(out)

    ref = pointpillar_scatter_reference(pillar_features, coords, batch_size,
                                        grid_size)
    assert out.shape == (batch_size, C * nz, ny, nx), out.shape
    assert jnp.array_equal(out, ref), "mismatch vs reference scatter"

    print("KERNEL_OK")
</pallas_src>

<mosaic_0001>
module attributes {stable_mosaic.version = 11 : i64} {
  func.func @_scatter_kernel(%arg0: i32, %arg1: memref<256xi32, #tpu.memory_space<smem>>, %arg2: memref<128x64xf32, #tpu.memory_space<vmem>>, %arg3: memref<1032x64xf32, #tpu.memory_space<any>>, %arg4: memref<1032x64xf32, #tpu.memory_space<any>>, %arg5: memref<16x!tpu.dma_semaphore, #tpu.memory_space<semaphore_mem>>) attributes {dimension_semantics = [#tpu.dimension_semantics<arbitrary>], iteration_bounds = array<i64: 2>, scalar_prefetch = 0 : i64, scratch_operands = 1 : i64, tpu.core_type = #tpu.core_type<tc>, window_params = [{transform_indices = @transform_0, window_bounds = array<i64: 256>}, {transform_indices = @transform_1, window_bounds = array<i64: 128, 64>}, {}, {}]} {
    %c128_i32 = arith.constant 128 : i32
    %0 = arith.muli %arg0, %c128_i32 : i32
    %c0_i32 = arith.constant 0 : i32
    %c128_i32_0 = arith.constant 128 : i32
    %1 = arith.addi %c0_i32, %c128_i32_0 : i32
    %c1_i32 = arith.constant 1 : i32
    scf.for %arg6 = %c0_i32 to %1 step %c1_i32  : i32 {
      %c1_i32_5 = arith.constant 1 : i32
      %3 = arith.muli %arg6, %c1_i32_5 : i32
      %c0_i32_6 = arith.constant 0 : i32
      %4 = arith.addi %c0_i32_6, %3 : i32
      %c16_i32_7 = arith.constant 16 : i32
      %5 = arith.cmpi sge, %4, %c16_i32_7 : i32
      %6 = arith.extui %5 : i1 to i32
      %c0_i32_8 = arith.constant 0 : i32
      %7 = arith.cmpi ne, %6, %c0_i32_8 : i32
      scf.if %7 {
        %c16_i32_17 = arith.constant 16 : i32
        %27 = arith.subi %4, %c16_i32_17 : i32
        %28 = arith.addi %0, %27 : i32
        %29 = arith.index_cast %28 : i32 to index
        %30 = memref.load %arg1[%29] : memref<256xi32, #tpu.memory_space<smem>>
        %c16_i32_18 = arith.constant 16 : i32
        %c0_i32_19 = arith.constant 0 : i32
        %31 = arith.cmpi eq, %c16_i32_18, %c0_i32_19 : i32
        %c1_i32_20 = arith.constant 1 : i32
        %32 = arith.select %31, %c1_i32_20, %c16_i32_18 : i32
        %33 = arith.remsi %27, %32 : i32
        %c0_i32_21 = arith.constant 0 : i32
        %34 = arith.cmpi ne, %33, %c0_i32_21 : i32
        %c0_i32_22 = arith.constant 0 : i32
        %35 = arith.cmpi slt, %33, %c0_i32_22 : i32
        %c0_i32_23 = arith.constant 0 : i32
        %36 = arith.cmpi slt, %32, %c0_i32_23 : i32
        %37 = arith.xori %35, %36 : i1
        %38 = arith.andi %37, %34 : i1
        %39 = arith.addi %33, %32 : i32
        %40 = arith.select %38, %39, %33 : i32
        %c0_i32_24 = arith.constant 0 : i32
        %41 = tpu.memref_slice %arg2[%27, %c0_i32_24] : memref<128x64xf32, #tpu.memory_space<vmem>> -> memref<1x64xf32, #tpu.memory_space<vmem>>
        %42 = tpu.memref_squeeze %41 : memref<1x64xf32, #tpu.memory_space<vmem>> -> memref<64xf32, #tpu.memory_space<vmem>>
        %c0_i32_25 = arith.constant 0 : i32
        %43 = tpu.memref_slice %arg4[%30, %c0_i32_25] : memref<1032x64xf32, #tpu.memory_space<any>> -> memref<1x64xf32, #tpu.memory_space<any>>
        %44 = tpu.memref_squeeze %43 : memref<1x64xf32, #tpu.memory_space<any>> -> memref<64xf32, #tpu.memory_space<any>>
        %45 = tpu.memref_slice %arg5[%40] : memref<16x!tpu.dma_semaphore, #tpu.memory_space<semaphore_mem>> -> memref<1x!tpu.dma_semaphore, #tpu.memory_space<semaphore_mem>>
        %46 = tpu.memref_squeeze %45 : memref<1x!tpu.dma_semaphore, #tpu.memory_space<semaphore_mem>> -> memref<!tpu.dma_semaphore, #tpu.memory_space<semaphore_mem>>
        tpu.wait_dma2 semaphore(%46 : memref<!tpu.dma_semaphore, #tpu.memory_space<semaphore_mem>>) src(%42 : memref<64xf32, #tpu.memory_space<vmem>>) dst(%44 : memref<64xf32, #tpu.memory_space<any>>)
      } else {
      }
      %8 = arith.addi %0, %4 : i32
      %9 = arith.index_cast %8 : i32 to index
      %10 = memref.load %arg1[%9] : memref<256xi32, #tpu.memory_space<smem>>
      %c16_i32_9 = arith.constant 16 : i32
      %c0_i32_10 = arith.constant 0 : i32
      %11 = arith.cmpi eq, %c16_i32_9, %c0_i32_10 : i32
      %c1_i32_11 = arith.constant 1 : i32
      %12 = arith.select %11, %c1_i32_11, %c16_i32_9 : i32
      %13 = arith.remsi %4, %12 : i32
      %c0_i32_12 = arith.constant 0 : i32
      %14 = arith.cmpi ne, %13, %c0_i32_12 : i32
      %c0_i32_13 = arith.constant 0 : i32
      %15 = arith.cmpi slt, %13, %c0_i32_13 : i32
      %c0_i32_14 = arith.constant 0 : i32
      %16 = arith.cmpi slt, %12, %c0_i32_14 : i32
      %17 = arith.xori %15, %16 : i1
      %18 = arith.andi %17, %14 : i1
      %19 = arith.addi %13, %12 : i32
      %20 = arith.select %18, %19, %13 : i32
      %c0_i32_15 = arith.constant 0 : i32
      %21 = tpu.memref_slice %arg2[%4, %c0_i32_15] : memref<128x64xf32, #tpu.memory_space<vmem>> -> memref<1x64xf32, #tpu.memory_space<vmem>>
      %22 = tpu.memref_squeeze %21 : memref<1x64xf32, #tpu.memory_space<vmem>> -> memref<64xf32, #tpu.memory_space<vmem>>
      %c0_i32_16 = arith.constant 0 : i32
      %23 = tpu.memref_slice %arg4[%10, %c0_i32_16] : memref<1032x64xf32, #tpu.memory_space<any>> -> memref<1x64xf32, #tpu.memory_space<any>>
      %24 = tpu.memref_squeeze %23 : memref<1x64xf32, #tpu.memory_space<any>> -> memref<64xf32, #tpu.memory_space<any>>
      %25 = tpu.memref_slice %arg5[%20] : memref<16x!tpu.dma_semaphore, #tpu.memory_space<semaphore_mem>> -> memref<1x!tpu.dma_semaphore, #tpu.memory_space<semaphore_mem>>
      %26 = tpu.memref_squeeze %25 : memref<1x!tpu.dma_semaphore, #tpu.memory_space<semaphore_mem>> -> memref<!tpu.dma_semaphore, #tpu.memory_space<semaphore_mem>>
      tpu.enqueue_dma source(%22 : memref<64xf32, #tpu.memory_space<vmem>>) target(%24 : memref<64xf32, #tpu.memory_space<any>>) target_semaphore(%26 : memref<!tpu.dma_semaphore, #tpu.memory_space<semaphore_mem>>)
    }
    %c128_i32_1 = arith.constant 128 : i32
    %c0_i32_2 = arith.constant 0 : i32
    %c16_i32 = arith.constant 16 : i32
    %2 = arith.addi %c0_i32_2, %c16_i32 : i32
    %c1_i32_3 = arith.constant 1 : i32
    scf.for %arg6 = %c0_i32_2 to %2 step %c1_i32_3  : i32 {
      %c1_i32_5 = arith.constant 1 : i32
      %3 = arith.muli %arg6, %c1_i32_5 : i32
      %c112_i32 = arith.constant 112 : i32
      %4 = arith.addi %c112_i32, %3 : i32
      %5 = arith.addi %0, %4 : i32
      %6 = arith.index_cast %5 : i32 to index
      %7 = memref.load %arg1[%6] : memref<256xi32, #tpu.memory_space<smem>>
      %c16_i32_6 = arith.constant 16 : i32
      %c0_i32_7 = arith.constant 0 : i32
      %8 = arith.cmpi eq, %c16_i32_6, %c0_i32_7 : i32
      %c1_i32_8 = arith.constant 1 : i32
      %9 = arith.select %8, %c1_i32_8, %c16_i32_6 : i32
      %10 = arith.remsi %4, %9 : i32
      %c0_i32_9 = arith.constant 0 : i32
      %11 = arith.cmpi ne, %10, %c0_i32_9 : i32
      %c0_i32_10 = arith.constant 0 : i32
      %12 = arith.cmpi slt, %10, %c0_i32_10 : i32
      %c0_i32_11 = arith.constant 0 : i32
      %13 = arith.cmpi slt, %9, %c0_i32_11 : i32
      %14 = arith.xori %12, %13 : i1
      %15 = arith.andi %14, %11 : i1
      %16 = arith.addi %10, %9 : i32
      %17 = arith.select %15, %16, %10 : i32
      %c0_i32_12 = arith.constant 0 : i32
      %18 = tpu.memref_slice %arg2[%4, %c0_i32_12] : memref<128x64xf32, #tpu.memory_space<vmem>> -> memref<1x64xf32, #tpu.memory_space<vmem>>
      %19 = tpu.memref_squeeze %18 : memref<1x64xf32, #tpu.memory_space<vmem>> -> memref<64xf32, #tpu.memory_space<vmem>>
      %c0_i32_13 = arith.constant 0 : i32
      %20 = tpu.memref_slice %arg4[%7, %c0_i32_13] : memref<1032x64xf32, #tpu.memory_space<any>> -> memref<1x64xf32, #tpu.memory_space<any>>
      %21 = tpu.memref_squeeze %20 : memref<1x64xf32, #tpu.memory_space<any>> -> memref<64xf32, #tpu.memory_space<any>>
      %22 = tpu.memref_slice %arg5[%17] : memref<16x!tpu.dma_semaphore, #tpu.memory_space<semaphore_mem>> -> memref<1x!tpu.dma_semaphore, #tpu.memory_space<semaphore_mem>>
      %23 = tpu.memref_squeeze %22 : memref<1x!tpu.dma_semaphore, #tpu.memory_space<semaphore_mem>> -> memref<!tpu.dma_semaphore, #tpu.memory_space<semaphore_mem>>
      tpu.wait_dma2 semaphore(%23 : memref<!tpu.dma_semaphore, #tpu.memory_space<semaphore_mem>>) src(%19 : memref<64xf32, #tpu.memory_space<vmem>>) dst(%21 : memref<64xf32, #tpu.memory_space<any>>)
    }
    %c16_i32_4 = arith.constant 16 : i32
    return
  }
  func.func @transform_0(%arg0: i32) -> i32 {
    %c0_i32 = arith.constant 0 : i32
    %c0_i32_0 = arith.constant 0 : i32
    return %c0_i32 : i32
  }
  func.func @transform_1(%arg0: i32) -> (i32, i32) {
    %c0_i32 = arith.constant 0 : i32
    %c0_i32_0 = arith.constant 0 : i32
    return %arg0, %c0_i32 : i32, i32
  }
}

</mosaic_0001>

<llo_original>
// kernel: tpu_custom_call.1
$region0: #{tpu_custom_call.1}
  #allocation0 [shape = 'u32[]', space=smem, size = 0x4, offset = 0x4, fixed_abs, tag = 'smem constant byte address 0x4 - core index']
  #allocation1 [shape = 'u32[72,128]{1,0:T(1,128)}', space=vmem, size = 0x9000, scoped, tag = 'internal scratch']
  #allocation2 [shape = 's32[16]{0}', space=sflag, size = 0x40, scoped, tag = 'scratch operand']
  #allocation5 [shape = 's32[]', space=sflag, size = 0x4, offset = 0, fixed_abs, tag = 'sflag constant byte address 0x0 - dummy sync flag']
  %s0 = inlined_call_operand.vmem [shape: s32[256], index: 0, kind: input, shape index: {}]
  %s1 = inlined_call_operand.vmem [shape: f32[256,64], index: 1, kind: input, shape index: {}]
  %s2 = inlined_call_operand.vmem [shape: f32[1032,64], index: 2, kind: input, shape index: {}, may-alias: {2,3}]
  %s3 = inlined_call_operand.vmem [shape: f32[1032,64], index: 3, kind: output, shape index: {}, may-alias: {2,3}]
  %s4 = sld [smem:[#allocation0]]
  $region81: #{tpu_custom_call.1} parent=0
    _
  %s6 = ssub.s32 1, %s4
  %s7 = scalar_select 0, %s6, %s4
  $region1: #{tpu_custom_call.1} parent=0
    #allocation3 [shape = 'u8[1024]{0}', space=smem, size = 0x400, scoped, tag = 'input window, operand 0, single buffered']
    #allocation4 [shape = 's32[2]{0}', space=sflag, size = 0x8, scoped, tag = 'scoped memory for tpu_custom_call.1']
    %8 = vsyncpa [#allocation4], 0
    loop: start=0, step=1, limit=3
    $region2: #{tpu_custom_call.1} parent=1 // loop_pre_header
      _
    $region3: #{tpu_custom_call.1} parent=1 // loop_header
      %s10 = sphi 0, %s14
      %p11 = scmp.ge.s32.totalorder %s10, 3
      %s17 = sphi 0, %s17
      %s19 = sphi 0, %s17
      %s27 = sphi 0, %s19
      %s33 = sphi 0, %s35
      %s36 = sphi 0, %s33
      %s46 = sphi 0, %s36
    $region4: #{tpu_custom_call.1} parent=1 // loop_header_branch
      %13 = sbr.rel (%p11) target = $region8
    $region5: #{tpu_custom_call.1} parent=1 // loop_body
      %s15 = ssub.s32 %s10, 1
      %s16 = sadd.s32 %s10, 1
      %s18 = sadd.s32 %s17, 1
      %p20 = scmp.eq.s32.totalorder %s10, 1
      %p21 = scmp.ne.s32.totalorder %s17, %s19
      %p22 = scmp.eq.s32.totalorder %s10, 0
      %p23 = por %p21, %p22
      %p24 = scmp.ne.s32.totalorder %s17, %s19
      %p25 = scmp.eq.s32.totalorder %s15, 1
      %p26 = por %p24, %p25
      %p28 = scmp.ne.s32.totalorder %s19, %s27
      %p29 = scmp.eq.s32.totalorder %s15, 0
      %p30 = por %p28, %p29
      %s31 = ssub.s32 %s10, %s16
      %p32 = scmp.eq.s32.totalorder %s31, 0
      %s34 = sadd.s32 %s33, 1
      %s35 = scalar_select %p32, %s33, %s34
      %p37 = pneg %p32
      %p38 = scmp.eq.s32.totalorder %s10, 1
      %p39 = por %p37, %p38
      %p40 = scmp.ne.s32.totalorder %s33, %s36
      %p41 = scmp.eq.s32.totalorder %s10, 0
      %p42 = por %p40, %p41
      %p43 = scmp.ne.s32.totalorder %s33, %s36
      %p44 = scmp.eq.s32.totalorder %s15, 1
      %p45 = por %p43, %p44
      %p47 = scmp.ne.s32.totalorder %s36, %s46
      %p48 = scmp.eq.s32.totalorder %s15, 0
      %p49 = por %p47, %p48
      %p50 = scmp.le.s32.totalorder 1, %s10
      // Predicated region
      $region9: #{tpu_custom_call.1} parent=5 // pred_check
        %p51 = pneg %p50
      $region10: #{tpu_custom_call.1} parent=5 // pred_check_branch
        %53 = sbr.rel (%p51) target = $region12
      $region11: #{tpu_custom_call.1} parent=5 // pred_region
        %s54 = ssub.s32 %s10, 1
        // Predicated region
        $region13: #{tpu_custom_call.1} parent=11 // pred_check
          %p55 = pneg %p30
        $region14: #{tpu_custom_call.1} parent=11 // pred_check_branch
          %57 = sbr.rel (%p55) target = $region16
        $region15: #{tpu_custom_call.1} parent=11 // pred_region
          %59 = vsyncadd [#allocation4], 0
          %s61 = sshll.u32 %s0, 4
          %s62 = int_to_ptr.vmem [resolvable:$true] %s61
          %64 = dma.vmem_to_smem %s62, 32, [#allocation3], [#allocation4]
        $region16: #{tpu_custom_call.1} parent=11 // pred_fallthru
          _
      $region12: #{tpu_custom_call.1} parent=5 // pred_fallthru
        _
      %p65 = scmp.lt.s32.totalorder %s10, 2
      // Predicated region
      $region17: #{tpu_custom_call.1} parent=5 // pred_check
        %p66 = pneg %p65
      $region18: #{tpu_custom_call.1} parent=5 // pred_check_branch
        %68 = sbr.rel (%p66) target = $region20
      $region19: #{tpu_custom_call.1} parent=5 // pred_region
        // Predicated region
        $region21: #{tpu_custom_call.1} parent=19 // pred_check
          %p69 = pneg %p42
        $region22: #{tpu_custom_call.1} parent=19 // pred_check_branch
          %71 = sbr.rel (%p69) target = $region24
        $region23: #{tpu_custom_call.1} parent=19 // pred_region
          %s72 = smul.u32 16, %s10
          %p73 = scmp.lt.s32.totalorder %s72, 31
          %s74 = scalar_select %p73, %s72, 31
          %s75 = smul.addr %s74, 8
          %s76 = scalar_lea.vmem %s1, %s75
          %s77 = smul.u32 16, %s10
        $region24: #{tpu_custom_call.1} parent=19 // pred_fallthru
          _
      $region20: #{tpu_custom_call.1} parent=5 // pred_fallthru
        _
      %p78 = scmp.le.s32.totalorder 1, %s10
      // Predicated region
      $region25: #{tpu_custom_call.1} parent=5 // pred_check
        %p79 = pneg %p78
      $region26: #{tpu_custom_call.1} parent=5 // pred_check_branch
        %81 = sbr.rel (%p79) target = $region28
      $region27: #{tpu_custom_call.1} parent=5 // pred_region
        %s82 = ssub.s32 %s10, 1
        // Predicated region
        $region29: #{tpu_custom_call.1} parent=27 // pred_check
          %p83 = pneg %p30
        $region30: #{tpu_custom_call.1} parent=27 // pred_check_branch
          %85 = sbr.rel (%p83) target = $region32
        $region31: #{tpu_custom_call.1} parent=27 // pred_region
          %87 = dma.done [#allocation4], 32
        $region32: #{tpu_custom_call.1} parent=27 // pred_fallthru
          _
        %88 = sfence
        %p89 = pneg %p30
        %p90 = pneg %p26
        %s91 = smul.u32 16, %s15
        %p92 = scmp.lt.s32.totalorder %s91, 31
        %s93 = scalar_select %p92, %s91, 31
        %s94 = smul.addr %s93, 8
        %s95 = scalar_lea.vmem %s1, %s94
        %p96 = pneg %p49
        %p97 = pneg %p45
        %s98 = smul.u32 16, %s15
        %p99 = scmp.lt.s32.totalorder %s98, 31
        %s100 = scalar_select %p99, %s98, 31
        %s101 = smul.addr %s100, 8
        %s102 = scalar_lea.vmem %s1, %s101
        %s103 = smul.u32 16, %s15
        %s104 = smul.u32 %s15, 128
        loop: start=0, step=1, limit=128
        $region33: #{tpu_custom_call.1} parent=27 // loop_pre_header
          _
        $region34: #{tpu_custom_call.1} parent=27 // loop_header
          %s106 = sphi 0, %s110
          %p107 = scmp.ge.s32.totalorder %s106, 128
        $region35: #{tpu_custom_call.1} parent=27 // loop_header_branch
          %109 = sbr.rel (%p107) target = $region39
        $region36: #{tpu_custom_call.1} parent=27 // loop_body
          %p111 = scmp.ge.s32.totalorder %s106, 16
          // Predicated region
          $region40: #{tpu_custom_call.1} parent=36 // pred_check
            %p112 = pneg %p111
          $region41: #{tpu_custom_call.1} parent=36 // pred_check_branch
            %114 = sbr.rel (%p112) target = $region43
          $region42: #{tpu_custom_call.1} parent=36 // pred_region
            %s115 = ssub.s32 %s106, 16
            %s116 = sadd.s32 %s104, %s115
            %s117 = sld [smem:[#allocation3 + %s116]]
            %p118 = scmp.lt.s32.totalorder %s115, 0
            %s119 = ssub.s32 0, %s115
            %s120 = scalar_select %p118, %s119, %s115
            %s121 = sand.u32 %s120, 15
            %s122 = ssub.s32 0, %s121
            %s123 = scalar_select %p118, %s122, %s121
            %p124 = scmp.ne.s32.totalorder %s123, 0
            %p125 = scmp.lt.s32.totalorder %s123, 0
            %p126 = pnand %p125, %p124
            %p127 = pneg %p126
            %s128 = sadd.s32 %s123, 16
            %s129 = scalar_select %p127, %s128, %s123
            %s130 = scalar_lea.sflag [#allocation2], %s129
            %132 = dma.done %s130, 16
          $region43: #{tpu_custom_call.1} parent=36 // pred_fallthru
            _
          %s133 = sadd.s32 %s104, %s106
          %s134 = sld [smem:[#allocation3 + %s133]]
          %p135 = scmp.lt.s32.totalorder %s106, 0
          %s136 = ssub.s32 0, %s106
          %s137 = scalar_select %p135, %s136, %s106
          %s138 = sand.u32 %s137, 15
          %s139 = ssub.s32 0, %s138
          %s140 = scalar_select %p135, %s139, %s138
          %p141 = scmp.ne.s32.totalorder %s140, 0
          %p142 = scmp.lt.s32.totalorder %s140, 0
          %p143 = pnand %p142, %p141
          %p144 = pneg %p143
          %s145 = sadd.s32 %s140, 16
          %s146 = scalar_select %p144, %s145, %s140
          %s147 = scalar_lea.vmem %s102, %s106
          %s148 = scalar_lea.vmem %s3, %s134
          %s149 = scalar_lea.sflag [#allocation2], %s146
          // Predicated region
          $region44: #{tpu_custom_call.1} parent=36 // pred_check
            _
          $region45: #{tpu_custom_call.1} parent=36 // pred_check_branch
            %151 = sbr.rel target = $region47
          $region46: #{tpu_custom_call.1} parent=36 // pred_region
            // Predicated region
            $region59: #{tpu_custom_call.1} parent=46 // pred_check
              _
            $region60: #{tpu_custom_call.1} parent=46 // pred_check_branch
              %167 = sbr.rel (0) target = $region62
            $region61: #{tpu_custom_call.1} parent=46 // pred_region
              %s169 = ssub.s32 2, 1
              loop: start=0, step=1, limit=1
              $region63: #{tpu_custom_call.1} parent=61 // loop_pre_header
                _
              $region64: #{tpu_custom_call.1} parent=61 // loop_header
                %s171 = sphi 0, %s175
                %p172 = scmp.ge.s32.totalorder %s171, 1
                %s176 = sphi %s147, %s147
                %s177 = sphi %s148, %s148
              $region65: #{tpu_custom_call.1} parent=61 // loop_header_branch
                %174 = sbr.rel (%p172) target = $region69
              $region66: #{tpu_custom_call.1} parent=61 // loop_body
                %v178 = vld [vmem:[%s176] sm:%s169]
                %179 = vst [vmem:[%s177] sm:%s169] %v178
              $region67: #{tpu_custom_call.1} parent=61 // loop_footer
                %s175 = sadd.s32 1, %s171
              $region68: #{tpu_custom_call.1} parent=61 // loop_footer_branch
                %170 = sbr.rel target = $region64
              $region69: #{tpu_custom_call.1} parent=61 // loop_exit
                _
            $region62: #{tpu_custom_call.1} parent=46 // pred_fallthru
              _
          $region47: #{tpu_custom_call.1} parent=36 // pred_fallthru
            _
          // Predicated region
          $region48: #{tpu_custom_call.1} parent=36 // pred_check
            _
          $region49: #{tpu_custom_call.1} parent=36 // pred_check_branch
            %153 = sbr.rel (0) target = $region51
          $region50: #{tpu_custom_call.1} parent=36 // pred_region
            %s155 = ssub.s32 2, 1
            loop: start=0, step=1, limit=1
            $region52: #{tpu_custom_call.1} parent=50 // loop_pre_header
              _
            $region53: #{tpu_custom_call.1} parent=50 // loop_header
              %s157 = sphi 0, %s161
              %p158 = scmp.ge.s32.totalorder %s157, 1
              %s162 = sphi %s147, %s147
              %s163 = sphi %s148, %s148
            $region54: #{tpu_custom_call.1} parent=50 // loop_header_branch
              %160 = sbr.rel (%p158) target = $region58
            $region55: #{tpu_custom_call.1} parent=50 // loop_body
              %v164 = vld [vmem:[%s162] sm:%s155]
              %165 = vst [vmem:[%s163] sm:%s155] %v164
            $region56: #{tpu_custom_call.1} parent=50 // loop_footer
              %s161 = sadd.s32 1, %s157
            $region57: #{tpu_custom_call.1} parent=50 // loop_footer_branch
              %156 = sbr.rel target = $region53
            $region58: #{tpu_custom_call.1} parent=50 // loop_exit
              _
          $region51: #{tpu_custom_call.1} parent=36 // pred_fallthru
            _
          // Predicated region
          $region70: #{tpu_custom_call.1} parent=36 // pred_check
            _
          $region71: #{tpu_custom_call.1} parent=36 // pred_check_branch
            %182 = sbr.rel (0) target = $region73
          $region72: #{tpu_custom_call.1} parent=36 // pred_region
            %183 = vsyncadd %s149, 16
          $region73: #{tpu_custom_call.1} parent=36 // pred_fallthru
            _
        $region37: #{tpu_custom_call.1} parent=27 // loop_footer
          %s110 = sadd.s32 1, %s106
        $region38: #{tpu_custom_call.1} parent=27 // loop_footer_branch
          %105 = sbr.rel target = $region34
        $region39: #{tpu_custom_call.1} parent=27 // loop_exit
          _
        loop: start=0, step=1, limit=16
        $region74: #{tpu_custom_call.1} parent=27 // loop_pre_header
          _
        $region75: #{tpu_custom_call.1} parent=27 // loop_header
          %s185 = sphi 0, %s189
          %p186 = scmp.ge.s32.totalorder %s185, 16
        $region76: #{tpu_custom_call.1} parent=27 // loop_header_branch
          %188 = sbr.rel (%p186) target = $region80
        $region77: #{tpu_custom_call.1} parent=27 // loop_body
          %s190 = sadd.s32 %s185, 112
          %s191 = sadd.s32 %s104, %s190
          %s192 = sld [smem:[#allocation3 + %s191]]
          %p193 = scmp.lt.s32.totalorder %s190, 0
          %s194 = ssub.s32 0, %s190
          %s195 = scalar_select %p193, %s194, %s190
          %s196 = sand.u32 %s195, 15
          %s197 = ssub.s32 0, %s196
          %s198 = scalar_select %p193, %s197, %s196
          %p199 = scmp.ne.s32.totalorder %s198, 0
          %p200 = scmp.lt.s32.totalorder %s198, 0
          %p201 = pnand %p200, %p199
          %p202 = pneg %p201
          %s203 = sadd.s32 %s198, 16
          %s204 = scalar_select %p202, %s203, %s198
          %s205 = scalar_lea.sflag [#allocation2], %s204
          %207 = dma.done %s205, 16
        $region78: #{tpu_custom_call.1} parent=27 // loop_footer
          %s189 = sadd.s32 1, %s185
        $region79: #{tpu_custom_call.1} parent=27 // loop_footer_branch
          %184 = sbr.rel target = $region75
        $region80: #{tpu_custom_call.1} parent=27 // loop_exit
          _
      $region28: #{tpu_custom_call.1} parent=5 // pred_fallthru
        _
    $region6: #{tpu_custom_call.1} parent=1 // loop_footer
      %s14 = sadd.s32 1, %s10
    $region7: #{tpu_custom_call.1} parent=1 // loop_footer_branch
      %9 = sbr.rel target = $region3
    $region8: #{tpu_custom_call.1} parent=1 // loop_exit
      _
    %208 = vsyncpa [#allocation4], 1
    %s209 = scalar_lea.sflag [#allocation4], 1
    %210 = vsyncpa %s209, 1
  %211 = vsyncmov [#allocation2]
  %s212 = vpop.sfrf %211
  %p213 = scmp.eq.s32.totalorder %s212, 0
  %p214 = pneg %p213
  %216 = shalt.err (%p214)
  %s217 = scalar_lea.sflag [#allocation2], 1
  %218 = vsyncmov %s217
  %s219 = vpop.sfrf %218
  %p220 = scmp.eq.s32.totalorder %s219, 0
  %p221 = pneg %p220
  %223 = shalt.err (%p221)
  %s224 = scalar_lea.sflag [#allocation2], 2
  %225 = vsyncmov %s224
  %s226 = vpop.sfrf %225
  %p227 = scmp.eq.s32.totalorder %s226, 0
  %p228 = pneg %p227
  %230 = shalt.err (%p228)
  %s231 = scalar_lea.sflag [#allocation2], 3
  %232 = vsyncmov %s231
  %s233 = vpop.sfrf %232
  %p234 = scmp.eq.s32.totalorder %s233, 0
  %p235 = pneg %p234
  %237 = shalt.err (%p235)
  %s238 = scalar_lea.sflag [#allocation2], 4
  %239 = vsyncmov %s238
  %s240 = vpop.sfrf %239
  %p241 = scmp.eq.s32.totalorder %s240, 0
  %p242 = pneg %p241
  %244 = shalt.err (%p242)
  %s245 = scalar_lea.sflag [#allocation2], 5
  %246 = vsyncmov %s245
  %s247 = vpop.sfrf %246
  %p248 = scmp.eq.s32.totalorder %s247, 0
  %p249 = pneg %p248
  %251 = shalt.err (%p249)
  %s252 = scalar_lea.sflag [#allocation2], 6
  %253 = vsyncmov %s252
  %s254 = vpop.sfrf %253
  %p255 = scmp.eq.s32.totalorder %s254, 0
  %p256 = pneg %p255
  %258 = shalt.err (%p256)
  %s259 = scalar_lea.sflag [#allocation2], 7
  %260 = vsyncmov %s259
  %s261 = vpop.sfrf %260
  %p262 = scmp.eq.s32.totalorder %s261, 0
  %p263 = pneg %p262
  %265 = shalt.err (%p263)
  %s266 = scalar_lea.sflag [#allocation2], 8
  %267 = vsyncmov %s266
  %s268 = vpop.sfrf %267
  %p269 = scmp.eq.s32.totalorder %s268, 0
  %p270 = pneg %p269
  %272 = shalt.err (%p270)
  %s273 = scalar_lea.sflag [#allocation2], 9
  %274 = vsyncmov %s273
  %s275 = vpop.sfrf %274
  %p276 = scmp.eq.s32.totalorder %s275, 0
  %p277 = pneg %p276
  %279 = shalt.err (%p277)
  %s280 = scalar_lea.sflag [#allocation2], 10
  %281 = vsyncmov %s280
  %s282 = vpop.sfrf %281
  %p283 = scmp.eq.s32.totalorder %s282, 0
  %p284 = pneg %p283
  %286 = shalt.err (%p284)
  %s287 = scalar_lea.sflag [#allocation2], 11
  %288 = vsyncmov %s287
  %s289 = vpop.sfrf %288
  %p290 = scmp.eq.s32.totalorder %s289, 0
  %p291 = pneg %p290
  %293 = shalt.err (%p291)
  %s294 = scalar_lea.sflag [#allocation2], 12
  %295 = vsyncmov %s294
  %s296 = vpop.sfrf %295
  %p297 = scmp.eq.s32.totalorder %s296, 0
  %p298 = pneg %p297
  %300 = shalt.err (%p298)
  %s301 = scalar_lea.sflag [#allocation2], 13
  %302 = vsyncmov %s301
  %s303 = vpop.sfrf %302
  %p304 = scmp.eq.s32.totalorder %s303, 0
  %p305 = pneg %p304
  %307 = shalt.err (%p305)
  %s308 = scalar_lea.sflag [#allocation2], 14
  %309 = vsyncmov %s308
  %s310 = vpop.sfrf %309
  %p311 = scmp.eq.s32.totalorder %s310, 0
  %p312 = pneg %p311
  %314 = shalt.err (%p312)
  %s315 = scalar_lea.sflag [#allocation2], 15
  %316 = vsyncmov %s315
  %s317 = vpop.sfrf %316
  %p318 = scmp.eq.s32.totalorder %s317, 0
  %p319 = pneg %p318
  %321 = shalt.err (%p319)

</llo_original>
